<compile_context>
chip_gen: v5e
topology: v5e:2x2
jax: 0.10.0
libtpu: 0.0.40
codegen_flags: <defaults>
</compile_context>

<pallas_src>
import functools

import jax
import jax.numpy as jnp
from jax.experimental import pallas as pl
from jax.experimental.pallas import tpu as pltpu

# ---------------- small synthetic config (consistent with SiglipMLP) -----------
HIDDEN = 32     # config.hidden_size
INTER = 64      # config.intermediate_size
BATCH = 2
SEQ = 16        # number of image tokens fed to the MLP


def _gelu_tanh(x):
    # matches torch.nn.functional.gelu(..., approximate='tanh')
    c = jnp.sqrt(2.0 / jnp.pi).astype(x.dtype)
    return 0.5 * x * (1.0 + jnp.tanh(c * (x + 0.044715 * x * x * x)))


# ---------------- fused Pallas kernel -------------------------------------------
def mlp_kernel(x_ref, w1_ref, b1_ref, w2_ref, b2_ref, o_ref):
    x = x_ref[...]                                                     # (bm, D)
    h = jnp.dot(x, w1_ref[...], preferred_element_type=jnp.float32) + b1_ref[...]
    h = _gelu_tanh(h)
    y = jnp.dot(h, w2_ref[...], preferred_element_type=jnp.float32) + b2_ref[...]
    o_ref[...] = y.astype(o_ref.dtype)


# ---------------- wrapper --------------------------------------------------------
def siglip_mlp(hidden_states, w1, b1, w2, b2, *, block_m=256):
    """hidden_states: (..., D); w1: (D, I); b1: (1, I); w2: (I, D); b2: (1, D)."""
    orig_shape = hidden_states.shape
    D = orig_shape[-1]
    I = w1.shape[1]

    x2d = hidden_states.reshape(-1, D)          # flatten batch*seq into rows
    M = x2d.shape[0]
    bm = M if M <= block_m else block_m         # one grid step for small inputs
    grid_m = pl.cdiv(M, bm)

    out2d = pl.pallas_call(
        mlp_kernel,
        out_shape=jax.ShapeDtypeStruct((M, D), hidden_states.dtype),
        grid=(grid_m,),
        in_specs=[
            pl.BlockSpec((bm, D), lambda i: (i, 0)),   # activation rows
            pl.BlockSpec((D, I), lambda i: (0, 0)),    # fc1 weight (resident)
            pl.BlockSpec((1, I), lambda i: (0, 0)),    # fc1 bias
            pl.BlockSpec((I, D), lambda i: (0, 0)),    # fc2 weight (resident)
            pl.BlockSpec((1, D), lambda i: (0, 0)),    # fc2 bias
        ],
        out_specs=pl.BlockSpec((bm, D), lambda i: (i, 0)),
        compiler_params=pltpu.CompilerParams(
            dimension_semantics=("parallel",)),        # row tiles are independent
    )(x2d, w1, b1, w2, b2)

    return out2d.reshape(orig_shape)


# ---------------- parameter init (deterministic, synthetic) ----------------------
def init_params(key):
    k1, k2, k3, k4 = jax.random.split(key, 4)
    scale = 0.02
    # Linear weights stored as (in, out) so the kernel computes x @ W + b
    # (mathematically identical to PyTorch's x @ W.T + b with W stored (out, in)).
    return {
        "w1": scale * jax.random.normal(k1, (HIDDEN, INTER), jnp.float32),
        "b1": scale * jax.random.normal(k2, (1, INTER), jnp.float32),
        "w2": scale * jax.random.normal(k3, (INTER, HIDDEN), jnp.float32),
        "b2": scale * jax.random.normal(k4, (1, HIDDEN), jnp.float32),
    }


# ---------------- pure-JAX reference (for a quick numeric sanity check) ----------
def siglip_mlp_ref(x, p):
    h = x @ p["w1"] + p["b1"]
    h = _gelu_tanh(h)
    return h @ p["w2"] + p["b2"]


if __name__ == "__main__":
    key = jax.random.PRNGKey(0)
    k_in, k_par = jax.random.split(key)

    hidden_states = jax.random.normal(k_in, (BATCH, SEQ, HIDDEN), jnp.float32)
    params = init_params(k_par)

    out = siglip_mlp(hidden_states, params["w1"], params["b1"],
                     params["w2"], params["b2"])
    out = jax.block_until_ready(out)

    assert out.shape == (BATCH, SEQ, HIDDEN), out.shape
    assert jnp.all(jnp.isfinite(out))

    ref = siglip_mlp_ref(hidden_states, params)
    assert jnp.allclose(out, ref, rtol=1e-5, atol=1e-5), "mismatch vs reference"

    print("KERNEL_OK")
</pallas_src>

<mosaic_0001>
module attributes {stable_mosaic.version = 11 : i64} {
  func.func @mlp_kernel(%arg0: i32, %arg1: memref<32x32xf32, #tpu.memory_space<vmem>>, %arg2: memref<32x64xf32, #tpu.memory_space<vmem>>, %arg3: memref<1x64xf32, #tpu.memory_space<vmem>>, %arg4: memref<64x32xf32, #tpu.memory_space<vmem>>, %arg5: memref<1x32xf32, #tpu.memory_space<vmem>>, %arg6: memref<32x32xf32, #tpu.memory_space<vmem>>) attributes {dimension_semantics = [#tpu.dimension_semantics<parallel>], iteration_bounds = array<i64: 1>, scalar_prefetch = 0 : i64, scratch_operands = 0 : i64, tpu.core_type = #tpu.core_type<tc>, window_params = [{transform_indices = @transform_0, window_bounds = array<i64: 32, 32>}, {pipeline_mode = #tpu.pipeline_mode<synchronous>, transform_indices = @transform_1, window_bounds = array<i64: 32, 64>}, {pipeline_mode = #tpu.pipeline_mode<synchronous>, transform_indices = @transform_2, window_bounds = array<i64: 1, 64>}, {pipeline_mode = #tpu.pipeline_mode<synchronous>, transform_indices = @transform_3, window_bounds = array<i64: 64, 32>}, {pipeline_mode = #tpu.pipeline_mode<synchronous>, transform_indices = @transform_4, window_bounds = array<i64: 1, 32>}, {transform_indices = @transform_5, window_bounds = array<i64: 32, 32>}]} {
    %c0 = arith.constant 0 : index
    %c0_0 = arith.constant 0 : index
    %0 = vector.load %arg1[%c0, %c0_0] : memref<32x32xf32, #tpu.memory_space<vmem>>, vector<32x32xf32>
    %c0_1 = arith.constant 0 : index
    %c0_2 = arith.constant 0 : index
    %1 = vector.load %arg2[%c0_1, %c0_2] : memref<32x64xf32, #tpu.memory_space<vmem>>, vector<32x64xf32>
    %cst = arith.constant dense<0.000000e+00> : vector<32x64xf32>
    %2 = tpu.matmul %0, %1, %cst {dimension_numbers = #tpu.dot_dimension_numbers<[1], [0], [0], [1], [0, 0, 1, 1], [], []>} : vector<32x32xf32>, vector<32x64xf32>, vector<32x64xf32> -> vector<32x64xf32>
    %c0_3 = arith.constant 0 : index
    %c0_4 = arith.constant 0 : index
    %3 = vector.load %arg3[%c0_3, %c0_4] : memref<1x64xf32, #tpu.memory_space<vmem>>, vector<1x64xf32>
    %4 = vector.broadcast %3 : vector<1x64xf32> to vector<32x64xf32>
    %5 = arith.addf %2, %4 : vector<32x64xf32>
    %cst_5 = arith.constant 0.636619746 : f32
    %6 = math.sqrt %cst_5 : f32
    %cst_6 = arith.constant 5.000000e-01 : f32
    %7 = vector.broadcast %cst_6 : f32 to vector<32x64xf32>
    %8 = arith.mulf %7, %5 : vector<32x64xf32>
    %cst_7 = arith.constant 4.471500e-02 : f32
    %9 = vector.broadcast %cst_7 : f32 to vector<32x64xf32>
    %10 = arith.mulf %9, %5 : vector<32x64xf32>
    %11 = arith.mulf %10, %5 : vector<32x64xf32>
    %12 = arith.mulf %11, %5 : vector<32x64xf32>
    %13 = arith.addf %5, %12 : vector<32x64xf32>
    %14 = vector.broadcast %6 : f32 to vector<32x64xf32>
    %15 = arith.mulf %14, %13 : vector<32x64xf32>
    %16 = math.tanh %15 : vector<32x64xf32>
    %cst_8 = arith.constant 1.000000e+00 : f32
    %17 = vector.broadcast %cst_8 : f32 to vector<32x64xf32>
    %18 = arith.addf %17, %16 : vector<32x64xf32>
    %19 = arith.mulf %8, %18 : vector<32x64xf32>
    %c0_9 = arith.constant 0 : index
    %c0_10 = arith.constant 0 : index
    %20 = vector.load %arg4[%c0_9, %c0_10] : memref<64x32xf32, #tpu.memory_space<vmem>>, vector<64x32xf32>
    %cst_11 = arith.constant dense<0.000000e+00> : vector<32x32xf32>
    %21 = tpu.matmul %19, %20, %cst_11 {dimension_numbers = #tpu.dot_dimension_numbers<[1], [0], [0], [1], [0, 0, 1, 1], [], []>} : vector<32x64xf32>, vector<64x32xf32>, vector<32x32xf32> -> vector<32x32xf32>
    %c0_12 = arith.constant 0 : index
    %c0_13 = arith.constant 0 : index
    %22 = vector.load %arg5[%c0_12, %c0_13] : memref<1x32xf32, #tpu.memory_space<vmem>>, vector<1x32xf32>
    %23 = vector.broadcast %22 : vector<1x32xf32> to vector<32x32xf32>
    %24 = arith.addf %21, %23 : vector<32x32xf32>
    %c0_14 = arith.constant 0 : index
    %c0_15 = arith.constant 0 : index
    %25 = vector.load %arg6[%c0_14, %c0_15] : memref<32x32xf32, #tpu.memory_space<vmem>>, vector<32x32xf32>
    tpu.vector_store %arg6[%c0_14, %c0_15], %24 {strides = array<i32>} : memref<32x32xf32, #tpu.memory_space<vmem>>, vector<32x32xf32>,
    return
  }
  func.func @transform_0(%arg0: i32) -> (i32, i32) {
    %c0_i32 = arith.constant 0 : i32
    %c0_i32_0 = arith.constant 0 : i32
    return %arg0, %c0_i32 : i32, i32
  }
  func.func @transform_1(%arg0: i32) -> (i32, i32) {
    %c0_i32 = arith.constant 0 : i32
    %c0_i32_0 = arith.constant 0 : i32
    %c0_i32_1 = arith.constant 0 : i32
    return %c0_i32, %c0_i32_0 : i32, i32
  }
  func.func @transform_2(%arg0: i32) -> (i32, i32) {
    %c0_i32 = arith.constant 0 : i32
    %c0_i32_0 = arith.constant 0 : i32
    %c0_i32_1 = arith.constant 0 : i32
    return %c0_i32, %c0_i32_0 : i32, i32
  }
  func.func @transform_3(%arg0: i32) -> (i32, i32) {
    %c0_i32 = arith.constant 0 : i32
    %c0_i32_0 = arith.constant 0 : i32
    %c0_i32_1 = arith.constant 0 : i32
    return %c0_i32, %c0_i32_0 : i32, i32
  }
  func.func @transform_4(%arg0: i32) -> (i32, i32) {
    %c0_i32 = arith.constant 0 : i32
    %c0_i32_0 = arith.constant 0 : i32
    %c0_i32_1 = arith.constant 0 : i32
    return %c0_i32, %c0_i32_0 : i32, i32
  }
  func.func @transform_5(%arg0: i32) -> (i32, i32) {
    %c0_i32 = arith.constant 0 : i32
    %c0_i32_0 = arith.constant 0 : i32
    return %arg0, %c0_i32 : i32, i32
  }
}

</mosaic_0001>

<llo_original>
// kernel: tpu_custom_call.1
$region0: #{tpu_custom_call.1}
  #allocation0 [shape = 'u32[]', space=smem, size = 0x4, offset = 0x4, fixed_abs, tag = 'smem constant byte address 0x4 - core index']
  #allocation1 [shape = 'u32[72,128]{1,0:T(1,128)}', space=vmem, size = 0x9000, scoped, tag = 'internal scratch']
  %s0 = inlined_call_operand.vmem [shape: f32[32,32], index: 0, kind: input, shape index: {}]
  %s1 = inlined_call_operand.vmem [shape: f32[32,64], index: 1, kind: input, shape index: {}]
  %s2 = inlined_call_operand.vmem [shape: f32[1,64], index: 2, kind: input, shape index: {}]
  %s3 = inlined_call_operand.vmem [shape: f32[64,32], index: 3, kind: input, shape index: {}]
  %s4 = inlined_call_operand.vmem [shape: f32[1,32], index: 4, kind: input, shape index: {}]
  %s5 = inlined_call_operand.hbm [shape: f32[32,32], index: 5, kind: output, shape index: {}]
  %s6 = sld [smem:[#allocation0]]
  $region30: #{tpu_custom_call.1} parent=0
    _
  %s8 = ssub.s32 1, %s6
  %s9 = scalar_select 0, %s8, %s6
  $region1: #{tpu_custom_call.1} parent=0
    #allocation2 [shape = 'u8[16384]{0}', space=vmem, size = 0x4000, scoped, tag = 'output window, operand 0, single buffered']
    #allocation3 [shape = 's32[1]{0}', space=sflag, size = 0x4, scoped, tag = 'scoped memory for tpu_custom_call.1']
    %10 = vsyncpa [#allocation3], 0
    // Predicated region
    $region2: #{tpu_custom_call.1} parent=1 // pred_check
      _
    $region3: #{tpu_custom_call.1} parent=1 // pred_check_branch
      %12 = sbr.rel (0) target = $region5
    $region4: #{tpu_custom_call.1} parent=1 // pred_region
      _
    $region5: #{tpu_custom_call.1} parent=1 // pred_fallthru
      _
    // Predicated region
    $region6: #{tpu_custom_call.1} parent=1 // pred_check
      _
    $region7: #{tpu_custom_call.1} parent=1 // pred_check_branch
      %14 = sbr.rel (0) target = $region9
    $region8: #{tpu_custom_call.1} parent=1 // pred_region
      _
    $region9: #{tpu_custom_call.1} parent=1 // pred_fallthru
      _
    // Predicated region
    $region10: #{tpu_custom_call.1} parent=1 // pred_check
      _
    $region11: #{tpu_custom_call.1} parent=1 // pred_check_branch
      %16 = sbr.rel (0) target = $region13
    $region12: #{tpu_custom_call.1} parent=1 // pred_region
      _
    $region13: #{tpu_custom_call.1} parent=1 // pred_fallthru
      _
    // Predicated region
    $region14: #{tpu_custom_call.1} parent=1 // pred_check
      _
    $region15: #{tpu_custom_call.1} parent=1 // pred_check_branch
      %18 = sbr.rel (0) target = $region17
    $region16: #{tpu_custom_call.1} parent=1 // pred_region
      _
    $region17: #{tpu_custom_call.1} parent=1 // pred_fallthru
      _
    // Predicated region
    $region18: #{tpu_custom_call.1} parent=1 // pred_check
      _
    $region19: #{tpu_custom_call.1} parent=1 // pred_check_branch
      %20 = sbr.rel (0) target = $region21
    $region20: #{tpu_custom_call.1} parent=1 // pred_region
      _
    $region21: #{tpu_custom_call.1} parent=1 // pred_fallthru
      _
    %v21 = vld [vmem:[%s0] sm:$0xff]
    %v22 = vld [vmem:[%s0 + $0x8] sm:$0xff]
    %v23 = vld [vmem:[%s0 + $0x10] sm:$0xff]
    %v24 = vld [vmem:[%s0 + $0x18] sm:$0xff]
    %v25 = vld [vmem:[%s1] sm:$0xff]
    %v26 = vld [vmem:[%s1 + $0x8] sm:$0xff]
    %v27 = vld [vmem:[%s1 + $0x10] sm:$0xff]
    %v28 = vld [vmem:[%s1 + $0x18] sm:$0xff]
    %v29 = vld [vmem:[%s2] sm:$0x1]
    %v31 = vperm.slane %v29, 0
    %vm33 = vcmask 261120
    %v35 = vsel %vm33, %v21, 0
    %v38 = vsel %vm33, %v22, 0
    %v41 = vsel %vm33, %v23, 0
    %v44 = vsel %vm33, %v24, 0
    %46 = vmatpush.msra.mxu0 0.0
    %47 = vmatpush.msra.mxu0 0.0
    %48 = vmatpush.msra.mxu0 0.0
    %49 = vmatpush.msra.mxu0 0.0
    %50 = vmatpush.msra.mxu0 0.0
    %51 = vmatpush.msra.mxu0 0.0
    %52 = vmatpush.msra.mxu0 0.0
    %53 = vmatpush.msra.mxu0 0.0
    %54 = vmatpush.msra.mxu0 0.0
    %55 = vmatpush.msra.mxu0 0.0
    %56 = vmatpush.msra.mxu0 0.0
    %57 = vmatpush.msra.mxu0 0.0
    %58 = vmatpush.msra.mxu0 %v28
    %59 = vmatpush.msra.mxu0 %v27
    %60 = vmatpush.msra.mxu0 %v26
    %61 = vmatpush.msra.mxu0 %v25
    %62 = vmatmul.f32.gmra.mxu0 %v35
    %v63 = vpop.f32.mrf.mxu0
    %v64 = vadd.f32 %v31, %v63
    %65 = vmatmul.f32.gmra.mxu0 %v38
    %v66 = vpop.f32.mrf.mxu0
    %v67 = vadd.f32 %v31, %v66
    %68 = vmatmul.f32.gmra.mxu0 %v41
    %v69 = vpop.f32.mrf.mxu0
    %v70 = vadd.f32 %v31, %v69
    %71 = vmatmul.f32.gmra.mxu0 %v44
    %v72 = vpop.f32.mrf.mxu0
    %v73 = vadd.f32 %v31, %v72
    %74 = vdwg.mxu0
    %v75 = vmul.f32 %v64, 0.5
    %v76 = vmul.f32 %v67, 0.5
    %v77 = vmul.f32 %v70, 0.5
    %v78 = vmul.f32 %v73, 0.5
    %v79 = vmul.f32 %v64, 0.044715
    %v80 = vmul.f32 %v67, 0.044715
    %v81 = vmul.f32 %v70, 0.044715
    %v82 = vmul.f32 %v73, 0.044715
    %v83 = vmul.f32 %v79, %v64
    %v84 = vmul.f32 %v80, %v67
    %v85 = vmul.f32 %v81, %v70
    %v86 = vmul.f32 %v82, %v73
    %v87 = vmul.f32 %v83, %v64
    %v88 = vmul.f32 %v84, %v67
    %v89 = vmul.f32 %v85, %v70
    %v90 = vmul.f32 %v86, %v73
    %v91 = vadd.f32 %v64, %v87
    %v92 = vadd.f32 %v67, %v88
    %v93 = vadd.f32 %v70, %v89
    %v94 = vadd.f32 %v73, %v90
    %v95 = vmul.f32 %v91, 0.7978845
    %v96 = vmul.f32 %v92, 0.7978845
    %v97 = vmul.f32 %v93, 0.7978845
    %v98 = vmul.f32 %v94, 0.7978845
    %v99 = vtanh.pop %v95
    %v100 = vtanh.pop %v96
    %v101 = vtanh.pop %v97
    %v102 = vtanh.pop %v98
    %v103 = vadd.f32 %v99, 1.0
    %v104 = vadd.f32 %v100, 1.0
    %v105 = vadd.f32 %v101, 1.0
    %v106 = vadd.f32 %v102, 1.0
    %v107 = vmul.f32 %v75, %v103
    %v108 = vmul.f32 %v76, %v104
    %v109 = vmul.f32 %v77, %v105
    %v110 = vmul.f32 %v78, %v106
    %v111 = vld [vmem:[%s3] sm:$0xff]
    %v112 = vld [vmem:[%s3 + $0x8] sm:$0xff]
    %v113 = vld [vmem:[%s3 + $0x10] sm:$0xff]
    %v114 = vld [vmem:[%s3 + $0x18] sm:$0xff]
    %v115 = vld [vmem:[%s3 + $0x20] sm:$0xff]
    %v116 = vld [vmem:[%s3 + $0x28] sm:$0xff]
    %v117 = vld [vmem:[%s3 + $0x30] sm:$0xff]
    %v118 = vld [vmem:[%s3 + $0x38] sm:$0xff]
    %v119 = vld [vmem:[%s4] sm:$0x1]
    %v121 = vperm.slane %v119, 0
    %vm123 = vcmask 523264
    %v125 = vsel %vm123, %v107, 0
    %v128 = vsel %vm123, %v108, 0
    %v131 = vsel %vm123, %v109, 0
    %v134 = vsel %vm123, %v110, 0
    %136 = vmatpush.msra.mxu0 0.0
    %137 = vmatpush.msra.mxu0 0.0
    %138 = vmatpush.msra.mxu0 0.0
    %139 = vmatpush.msra.mxu0 0.0
    %140 = vmatpush.msra.mxu0 0.0
    %141 = vmatpush.msra.mxu0 0.0
    %142 = vmatpush.msra.mxu0 0.0
    %143 = vmatpush.msra.mxu0 0.0
    %144 = vmatpush.msra.mxu0 %v118
    %145 = vmatpush.msra.mxu0 %v117
    %146 = vmatpush.msra.mxu0 %v116
    %147 = vmatpush.msra.mxu0 %v115
    %148 = vmatpush.msra.mxu0 %v114
    %149 = vmatpush.msra.mxu0 %v113
    %150 = vmatpush.msra.mxu0 %v112
    %151 = vmatpush.msra.mxu0 %v111
    %152 = vmatmul.f32.gmra.mxu0 %v125
    %v153 = vpop.f32.mrf.mxu0
    %v154 = vadd.f32 %v121, %v153
    %155 = vmatmul.f32.gmra.mxu0 %v128
    %v156 = vpop.f32.mrf.mxu0
    %v157 = vadd.f32 %v121, %v156
    %158 = vmatmul.f32.gmra.mxu0 %v131
    %v159 = vpop.f32.mrf.mxu0
    %v160 = vadd.f32 %v121, %v159
    %161 = vmatmul.f32.gmra.mxu0 %v134
    %v162 = vpop.f32.mrf.mxu0
    %v163 = vadd.f32 %v121, %v162
    %164 = vdwg.mxu0
    %165 = vst.msk [vmem:[#allocation2] sm:$0xff] %vm33, %v154
    %166 = vst.msk [vmem:[#allocation2 + $0x8] sm:$0xff] %vm33, %v157
    %167 = vst.msk [vmem:[#allocation2 + $0x10] sm:$0xff] %vm33, %v160
    %168 = vst.msk [vmem:[#allocation2 + $0x18] sm:$0xff] %vm33, %v163
    // Predicated region
    $region22: #{tpu_custom_call.1} parent=1 // pred_check
      _
    $region23: #{tpu_custom_call.1} parent=1 // pred_check_branch
      %170 = sbr.rel (0) target = $region25
    $region24: #{tpu_custom_call.1} parent=1 // pred_region
      %172 = vsyncadd [#allocation3], 0
      %s173 = sshll.u32 [#allocation2], 4
      %s174 = int_to_ptr.vmem [resolvable:$true] %s173
      %s175 = sshll.u32 %s5, 4
      %s176 = int_to_ptr.hbm [resolvable:$true] %s175
      %181 = dma.vmem_to_hbm [thread:$0]  %s174, 512, %s176, [#allocation3], 128, 128, 8
    $region25: #{tpu_custom_call.1} parent=1 // pred_fallthru
      _
    // Predicated region
    $region26: #{tpu_custom_call.1} parent=1 // pred_check
      _
    $region27: #{tpu_custom_call.1} parent=1 // pred_check_branch
      %183 = sbr.rel (0) target = $region29
    $region28: #{tpu_custom_call.1} parent=1 // pred_region
      %185 = dma.done [#allocation3], 512
    $region29: #{tpu_custom_call.1} parent=1 // pred_fallthru
      _
    %186 = vsyncpa [#allocation3], 1

</llo_original>
